<compile_context>
chip_gen: v5e
topology: v5e:2x2
jax: 0.10.0
libtpu: 0.0.40
codegen_flags: <defaults>
</compile_context>

<pallas_src>
import numpy as np
import jax
import jax.numpy as jnp
from jax import lax
from jax.experimental import pallas as pl
from jax.experimental.pallas import tpu as pltpu


def word_encoder_kernel(x_ref, w1cat_ref, w2_ref, beff_ref, out_ref, idx_ref):
    # x_ref:     (TB, C*L)    f32  flattened batch tile
    # w1cat_ref: (C*L, 2*L2)  f32  conv1 Toeplitz, [even | odd] pool-branch columns
    # w2_ref:    (L2, L3)     f32  conv2 Toeplitz
    # beff_ref:  (1, L3)      f32  folded bias: b1 * sum(W2_toe, axis=0) + b2
    # out_ref:   (TB, L3)     f32  conv2 output
    # idx_ref:   (TB, L2)     i32  maxpool indices
    L2 = w2_ref.shape[0]
    x = x_ref[...]

    # conv1 fused with the even/odd de-interleave of the pooling stage: a single
    # MXU matmul whose RHS carries both pool branches side by side.
    res = jnp.dot(x, w1cat_ref[...], preferred_element_type=jnp.float32)  # (TB, 2*L2)
    left = res[:, :L2]
    right = res[:, L2:2 * L2]

    # MaxPool1d(2) with indices; PyTorch keeps the first index on ties -> left wins.
    # (b1 is omitted here: adding it to both branches changes neither max nor argmax;
    #  it is folded into the conv2 epilogue bias instead.)
    pooled = jnp.maximum(left, right)
    j = lax.broadcasted_iota(jnp.int32, pooled.shape, 1)
    # TODO(synk): PyTorch returns int64 indices; TPU kernel emits int32.
    idx_ref[...] = jnp.where(left >= right, 2 * j, 2 * j + 1)

    # conv2 (1 -> 1 channel) as one small MXU matmul + folded-bias epilogue.
    out_ref[...] = (jnp.dot(pooled, w2_ref[...],
                            preferred_element_type=jnp.float32)
                    + beff_ref[...])                                       # (TB, L3)


def _round_up(a, m):
    return ((a + m - 1) // m) * m


def _choose_tile(N):
    """Sublane-aligned batch tile; large to amortize per-step overhead, but kept to
    >=2 grid steps when the batch is big enough (v7x megacore)."""
    n8 = _round_up(N, 8)
    tb = min(1024, n8)
    if n8 >= 16:
        tb = min(tb, _round_up((N + 1) // 2, 8))
    return tb


def word_encoder_forward(x, w1, b1, w2, b2):
    """x: (N, C, L) f32. w1: (1, C, 30), b1: (1,), w2: (1, 1, 10), b2: (1,)."""
    N, C, L = x.shape
    K1 = w1.shape[-1]
    K2 = w2.shape[-1]
    L1 = L - K1 + 1            # conv1 output length
    L2 = L1 // 2               # maxpool output length
    L3 = L2 - K2 + 1           # conv2 output length
    CL = C * L

    # ---- weight prep (plain JAX, once, outside the kernel) ----
    # Block-Toeplitz for conv1: W1_toe[c*L + j, t] = w1[0, c, j - t] for 0 <= j-t < K1.
    w1_2d = w1.reshape(C, K1).astype(jnp.float32)
    jj = jnp.arange(L)[:, None]
    tt = jnp.arange(L1)[None, :]
    kk = jj - tt
    valid = (kk >= 0) & (kk < K1)
    W1_toe = jnp.where(valid[None, :, :],
                       w1_2d[:, jnp.clip(kk, 0, K1 - 1)], 0.0).reshape(CL, L1)
    # Fold the maxpool even/odd de-interleave into the conv1 weights, and fuse the
    # two branches into one RHS so the kernel does a single matmul per step.
    W1_even = W1_toe[:, 0:2 * L2:2]                     # (CL, L2)
    W1_odd = W1_toe[:, 1:2 * L2:2]                      # (CL, L2)
    W1_cat = jnp.concatenate([W1_even, W1_odd], axis=1)  # (CL, 2*L2)

    # Toeplitz for conv2: W2_toe[j, t] = w2[0, 0, j - t] for 0 <= j-t < K2.
    w2_1d = w2.reshape(K2).astype(jnp.float32)
    jj2 = jnp.arange(L2)[:, None]
    tt2 = jnp.arange(L3)[None, :]
    kk2 = jj2 - tt2
    valid2 = (kk2 >= 0) & (kk2 < K2)
    W2_toe = jnp.where(valid2, w2_1d[jnp.clip(kk2, 0, K2 - 1)], 0.0)  # (L2, L3)

    # Fold both biases into one epilogue vector: conv2(pooled + b1) + b2
    #   = conv2(pooled) + b1 * W2_toe.sum(axis=0) + b2.
    b_eff = (b1.reshape(()).astype(jnp.float32) * jnp.sum(W2_toe, axis=0)
             + b2.reshape(()).astype(jnp.float32)).reshape(1, L3)

    # ---- batch tiling ----
    TB = _choose_tile(N)
    N_pad = _round_up(N, TB)
    x_flat = x.reshape(N, CL).astype(jnp.float32)
    if N_pad != N:
        x_flat = jnp.pad(x_flat, ((0, N_pad - N), (0, 0)))
    grid = (N_pad // TB,)

    out, idx = pl.pallas_call(
        word_encoder_kernel,
        out_shape=(
            jax.ShapeDtypeStruct((N_pad, L3), jnp.float32),
            jax.ShapeDtypeStruct((N_pad, L2), jnp.int32),
        ),
        grid=grid,
        in_specs=[
            pl.BlockSpec((TB, CL), lambda n: (n, 0)),
            pl.BlockSpec((CL, 2 * L2), lambda n: (0, 0)),
            pl.BlockSpec((L2, L3), lambda n: (0, 0)),
            pl.BlockSpec((1, L3), lambda n: (0, 0)),
        ],
        out_specs=(
            pl.BlockSpec((TB, L3), lambda n: (n, 0)),
            pl.BlockSpec((TB, L2), lambda n: (n, 0)),
        ),
        compiler_params=pltpu.CompilerParams(
            dimension_semantics=("parallel",),
            vmem_limit_bytes=32 * 1024 * 1024),
    )(x_flat, W1_cat, W2_toe, b_eff)

    out = out[:N].reshape(N, 1, L3)
    idx = idx[:N].reshape(N, 1, L2)
    return out, idx


def ref_forward(x, w1, b1, w2, b2):
    """Pure-numpy reference mirroring the PyTorch module."""
    x, w1, b1, w2, b2 = map(np.asarray, (x, w1, b1, w2, b2))
    N, C, L = x.shape
    K1 = w1.shape[-1]
    L1 = L - K1 + 1
    out1 = np.zeros((N, 1, L1), np.float32)
    for n in range(N):
        for t in range(L1):
            out1[n, 0, t] = np.sum(x[n, :, t:t + K1] * w1[0]) + b1[0]
    L2 = L1 // 2
    pooled = np.zeros((N, 1, L2), np.float32)
    idx = np.zeros((N, 1, L2), np.int64)
    for n in range(N):
        for t in range(L2):
            a, b = out1[n, 0, 2 * t], out1[n, 0, 2 * t + 1]
            if a >= b:
                pooled[n, 0, t], idx[n, 0, t] = a, 2 * t
            else:
                pooled[n, 0, t], idx[n, 0, t] = b, 2 * t + 1
    K2 = w2.shape[-1]
    L3 = L2 - K2 + 1
    out2 = np.zeros((N, 1, L3), np.float32)
    for n in range(N):
        for t in range(L3):
            out2[n, 0, t] = np.sum(pooled[n, 0, t:t + K2] * w2[0, 0]) + b2[0]
    return out2, idx


if __name__ == "__main__":
    N, word_dim, L = 2, 4, 64   # conv1 -> 35, maxpool -> 17, conv2 -> 8

    key = jax.random.PRNGKey(0)
    kx, kw1, kb1, kw2, kb2 = jax.random.split(key, 5)
    x = jax.random.normal(kx, (N, word_dim, L), jnp.float32)
    w1 = jax.random.normal(kw1, (1, word_dim, 30), jnp.float32) * 0.1
    b1 = jax.random.normal(kb1, (1,), jnp.float32) * 0.1
    w2 = jax.random.normal(kw2, (1, 1, 10), jnp.float32) * 0.1
    b2 = jax.random.normal(kb2, (1,), jnp.float32) * 0.1

    out, idx = word_encoder_forward(x, w1, b1, w2, b2)
    out = jax.block_until_ready(out)
    idx = jax.block_until_ready(idx)

    ref_out, ref_idx = ref_forward(x, w1, b1, w2, b2)
    assert out.shape == (N, 1, 8) and idx.shape == (N, 1, 17)
    np.testing.assert_allclose(np.asarray(out), ref_out, rtol=1e-4, atol=1e-4)
    np.testing.assert_array_equal(np.asarray(idx), ref_idx.astype(np.int32))

    print("KERNEL_OK")
</pallas_src>

<mosaic_0001>
module attributes {stable_mosaic.version = 11 : i64} {
  func.func @word_encoder_kernel(%arg0: i32, %arg1: memref<8x256xf32, #tpu.memory_space<vmem>>, %arg2: memref<256x34xf32, #tpu.memory_space<vmem>>, %arg3: memref<17x8xf32, #tpu.memory_space<vmem>>, %arg4: memref<1x8xf32, #tpu.memory_space<vmem>>, %arg5: memref<8x8xf32, #tpu.memory_space<vmem>>, %arg6: memref<8x17xi32, #tpu.memory_space<vmem>>) attributes {dimension_semantics = [#tpu.dimension_semantics<parallel>], iteration_bounds = array<i64: 1>, scalar_prefetch = 0 : i64, scratch_operands = 0 : i64, tpu.core_type = #tpu.core_type<tc>, window_params = [{transform_indices = @transform_0, window_bounds = array<i64: 8, 256>}, {pipeline_mode = #tpu.pipeline_mode<synchronous>, transform_indices = @transform_1, window_bounds = array<i64: 256, 34>}, {pipeline_mode = #tpu.pipeline_mode<synchronous>, transform_indices = @transform_2, window_bounds = array<i64: 17, 8>}, {pipeline_mode = #tpu.pipeline_mode<synchronous>, transform_indices = @transform_3, window_bounds = array<i64: 1, 8>}, {transform_indices = @transform_4, window_bounds = array<i64: 8, 8>}, {transform_indices = @transform_5, window_bounds = array<i64: 8, 17>}]} {
    %c0 = arith.constant 0 : index
    %c0_0 = arith.constant 0 : index
    %0 = vector.load %arg1[%c0, %c0_0] : memref<8x256xf32, #tpu.memory_space<vmem>>, vector<8x256xf32>
    %c0_1 = arith.constant 0 : index
    %c0_2 = arith.constant 0 : index
    %1 = vector.load %arg2[%c0_1, %c0_2] : memref<256x34xf32, #tpu.memory_space<vmem>>, vector<256x34xf32>
    %cst = arith.constant dense<0.000000e+00> : vector<8x34xf32>
    %2 = tpu.matmul %0, %1, %cst {dimension_numbers = #tpu.dot_dimension_numbers<[1], [0], [0], [1], [0, 0, 1, 1], [], []>} : vector<8x256xf32>, vector<256x34xf32>, vector<8x34xf32> -> vector<8x34xf32>
    %3 = vector.extract_strided_slice %2 {offsets = [0, 0], sizes = [8, 17], strides = [1, 1]} : vector<8x34xf32> to vector<8x17xf32>
    %4 = vector.extract_strided_slice %2 {offsets = [0, 17], sizes = [8, 17], strides = [1, 1]} : vector<8x34xf32> to vector<8x17xf32>
    %5 = arith.maximumf %3, %4 : vector<8x17xf32>
    %6 = tpu.iota {dimensions = array<i32: 1>} : vector<8x17xi32>
    %7 = arith.cmpf oge, %3, %4 : vector<8x17xf32>
    %c2_i32 = arith.constant 2 : i32
    %8 = vector.broadcast %c2_i32 : i32 to vector<8x17xi32>
    %9 = arith.muli %8, %6 : vector<8x17xi32>
    %c2_i32_3 = arith.constant 2 : i32
    %10 = vector.broadcast %c2_i32_3 : i32 to vector<8x17xi32>
    %11 = arith.muli %10, %6 : vector<8x17xi32>
    %c1_i32 = arith.constant 1 : i32
    %12 = vector.broadcast %c1_i32 : i32 to vector<8x17xi32>
    %13 = arith.addi %11, %12 : vector<8x17xi32>
    %14 = arith.select %7, %9, %13 : vector<8x17xi1>, vector<8x17xi32>
    %c0_4 = arith.constant 0 : index
    %c0_5 = arith.constant 0 : index
    %15 = vector.load %arg6[%c0_4, %c0_5] : memref<8x17xi32, #tpu.memory_space<vmem>>, vector<8x17xi32>
    tpu.vector_store %arg6[%c0_4, %c0_5], %14 {strides = array<i32>} : memref<8x17xi32, #tpu.memory_space<vmem>>, vector<8x17xi32>,
    %c0_6 = arith.constant 0 : index
    %c0_7 = arith.constant 0 : index
    %16 = vector.load %arg3[%c0_6, %c0_7] : memref<17x8xf32, #tpu.memory_space<vmem>>, vector<17x8xf32>
    %cst_8 = arith.constant dense<0.000000e+00> : vector<8x8xf32>
    %17 = tpu.matmul %5, %16, %cst_8 {dimension_numbers = #tpu.dot_dimension_numbers<[1], [0], [0], [1], [0, 0, 1, 1], [], []>} : vector<8x17xf32>, vector<17x8xf32>, vector<8x8xf32> -> vector<8x8xf32>
    %c0_9 = arith.constant 0 : index
    %c0_10 = arith.constant 0 : index
    %18 = vector.load %arg4[%c0_9, %c0_10] : memref<1x8xf32, #tpu.memory_space<vmem>>, vector<1x8xf32>
    %19 = vector.broadcast %18 : vector<1x8xf32> to vector<8x8xf32>
    %20 = arith.addf %17, %19 : vector<8x8xf32>
    %c0_11 = arith.constant 0 : index
    %c0_12 = arith.constant 0 : index
    %21 = vector.load %arg5[%c0_11, %c0_12] : memref<8x8xf32, #tpu.memory_space<vmem>>, vector<8x8xf32>
    tpu.vector_store %arg5[%c0_11, %c0_12], %20 {strides = array<i32>} : memref<8x8xf32, #tpu.memory_space<vmem>>, vector<8x8xf32>,
    return
  }
  func.func @transform_0(%arg0: i32) -> (i32, i32) {
    %c0_i32 = arith.constant 0 : i32
    %c0_i32_0 = arith.constant 0 : i32
    return %arg0, %c0_i32 : i32, i32
  }
  func.func @transform_1(%arg0: i32) -> (i32, i32) {
    %c0_i32 = arith.constant 0 : i32
    %c0_i32_0 = arith.constant 0 : i32
    %c0_i32_1 = arith.constant 0 : i32
    return %c0_i32, %c0_i32_0 : i32, i32
  }
  func.func @transform_2(%arg0: i32) -> (i32, i32) {
    %c0_i32 = arith.constant 0 : i32
    %c0_i32_0 = arith.constant 0 : i32
    %c0_i32_1 = arith.constant 0 : i32
    return %c0_i32, %c0_i32_0 : i32, i32
  }
  func.func @transform_3(%arg0: i32) -> (i32, i32) {
    %c0_i32 = arith.constant 0 : i32
    %c0_i32_0 = arith.constant 0 : i32
    %c0_i32_1 = arith.constant 0 : i32
    return %c0_i32, %c0_i32_0 : i32, i32
  }
  func.func @transform_4(%arg0: i32) -> (i32, i32) {
    %c0_i32 = arith.constant 0 : i32
    %c0_i32_0 = arith.constant 0 : i32
    return %arg0, %c0_i32 : i32, i32
  }
  func.func @transform_5(%arg0: i32) -> (i32, i32) {
    %c0_i32 = arith.constant 0 : i32
    %c0_i32_0 = arith.constant 0 : i32
    return %arg0, %c0_i32 : i32, i32
  }
}

</mosaic_0001>

<llo_original>
// kernel: tpu_custom_call.1
$region0: #{tpu_custom_call.1}
  #allocation0 [shape = 'u32[]', space=smem, size = 0x4, offset = 0x4, fixed_abs, tag = 'smem constant byte address 0x4 - core index']
  #allocation1 [shape = 'u32[72,128]{1,0:T(1,128)}', space=vmem, size = 0x9000, scoped, tag = 'internal scratch']
  %s0 = inlined_call_operand.vmem [shape: f32[8,256], index: 0, kind: input, shape index: {}]
  %s1 = inlined_call_operand.vmem [shape: f32[256,34], index: 1, kind: input, shape index: {}]
  %s2 = inlined_call_operand.vmem [shape: f32[17,8], index: 2, kind: input, shape index: {}]
  %s3 = inlined_call_operand.vmem [shape: f32[1,8], index: 3, kind: input, shape index: {}]
  %s4 = inlined_call_operand.hbm [shape: f32[8,8], index: 4, kind: output, shape index: {0}]
  %s5 = inlined_call_operand.hbm [shape: s32[8,17], index: 5, kind: output, shape index: {1}]
  %6 = xla_tuple %s4, %s5
  %s7 = sld [smem:[#allocation0]]
  $region34: #{tpu_custom_call.1} parent=0
    _
  %s9 = ssub.s32 1, %s7
  %s10 = scalar_select 0, %s9, %s7
  $region1: #{tpu_custom_call.1} parent=0
    #allocation2 [shape = 'u8[4096]{0}', space=vmem, size = 0x1000, scoped, tag = 'output window, operand 0, single buffered']
    #allocation3 [shape = 's32[1]{0}', space=sflag, size = 0x4, scoped, tag = 'scoped memory for tpu_custom_call.1']
    #allocation4 [shape = 'u8[4096]{0}', space=vmem, size = 0x1000, scoped, tag = 'output window, operand 1, single buffered']
    #allocation5 [shape = 's32[1]{0}', space=sflag, size = 0x4, scoped, tag = 'scoped memory for tpu_custom_call.1']
    %11 = vsyncpa [#allocation3], 0
    %12 = vsyncpa [#allocation5], 0
    // Predicated region
    $region2: #{tpu_custom_call.1} parent=1 // pred_check
      _
    $region3: #{tpu_custom_call.1} parent=1 // pred_check_branch
      %14 = sbr.rel (0) target = $region5
    $region4: #{tpu_custom_call.1} parent=1 // pred_region
      _
    $region5: #{tpu_custom_call.1} parent=1 // pred_fallthru
      _
    // Predicated region
    $region6: #{tpu_custom_call.1} parent=1 // pred_check
      _
    $region7: #{tpu_custom_call.1} parent=1 // pred_check_branch
      %16 = sbr.rel (0) target = $region9
    $region8: #{tpu_custom_call.1} parent=1 // pred_region
      _
    $region9: #{tpu_custom_call.1} parent=1 // pred_fallthru
      _
    // Predicated region
    $region10: #{tpu_custom_call.1} parent=1 // pred_check
      _
    $region11: #{tpu_custom_call.1} parent=1 // pred_check_branch
      %18 = sbr.rel (0) target = $region13
    $region12: #{tpu_custom_call.1} parent=1 // pred_region
      _
    $region13: #{tpu_custom_call.1} parent=1 // pred_fallthru
      _
    // Predicated region
    $region14: #{tpu_custom_call.1} parent=1 // pred_check
      _
    $region15: #{tpu_custom_call.1} parent=1 // pred_check_branch
      %20 = sbr.rel (0) target = $region17
    $region16: #{tpu_custom_call.1} parent=1 // pred_region
      _
    $region17: #{tpu_custom_call.1} parent=1 // pred_fallthru
      _
    %v21 = vld [vmem:[%s0] sm:$0xff]
    %v22 = vld [vmem:[%s0 + $0x8] sm:$0xff]
    %v23 = vld [vmem:[%s1] sm:$0xff]
    %v24 = vld [vmem:[%s1 + $0x8] sm:$0xff]
    %v25 = vld [vmem:[%s1 + $0x10] sm:$0xff]
    %v26 = vld [vmem:[%s1 + $0x18] sm:$0xff]
    %v27 = vld [vmem:[%s1 + $0x20] sm:$0xff]
    %v28 = vld [vmem:[%s1 + $0x28] sm:$0xff]
    %v29 = vld [vmem:[%s1 + $0x30] sm:$0xff]
    %v30 = vld [vmem:[%s1 + $0x38] sm:$0xff]
    %v31 = vld [vmem:[%s1 + $0x40] sm:$0xff]
    %v32 = vld [vmem:[%s1 + $0x48] sm:$0xff]
    %v33 = vld [vmem:[%s1 + $0x50] sm:$0xff]
    %v34 = vld [vmem:[%s1 + $0x58] sm:$0xff]
    %v35 = vld [vmem:[%s1 + $0x60] sm:$0xff]
    %v36 = vld [vmem:[%s1 + $0x68] sm:$0xff]
    %v37 = vld [vmem:[%s1 + $0x70] sm:$0xff]
    %v38 = vld [vmem:[%s1 + $0x78] sm:$0xff]
    %v39 = vld [vmem:[%s1 + $0x80] sm:$0xff]
    %v40 = vld [vmem:[%s1 + $0x88] sm:$0xff]
    %v41 = vld [vmem:[%s1 + $0x90] sm:$0xff]
    %v42 = vld [vmem:[%s1 + $0x98] sm:$0xff]
    %v43 = vld [vmem:[%s1 + $0xa0] sm:$0xff]
    %v44 = vld [vmem:[%s1 + $0xa8] sm:$0xff]
    %v45 = vld [vmem:[%s1 + $0xb0] sm:$0xff]
    %v46 = vld [vmem:[%s1 + $0xb8] sm:$0xff]
    %v47 = vld [vmem:[%s1 + $0xc0] sm:$0xff]
    %v48 = vld [vmem:[%s1 + $0xc8] sm:$0xff]
    %v49 = vld [vmem:[%s1 + $0xd0] sm:$0xff]
    %v50 = vld [vmem:[%s1 + $0xd8] sm:$0xff]
    %v51 = vld [vmem:[%s1 + $0xe0] sm:$0xff]
    %v52 = vld [vmem:[%s1 + $0xe8] sm:$0xff]
    %v53 = vld [vmem:[%s1 + $0xf0] sm:$0xff]
    %v54 = vld [vmem:[%s1 + $0xf8] sm:$0xff]
    %55 = vmatpush.msra.mxu0 %v38
    %56 = vmatpush.msra.mxu0 %v37
    %57 = vmatpush.msra.mxu0 %v36
    %58 = vmatpush.msra.mxu0 %v35
    %59 = vmatpush.msra.mxu0 %v34
    %60 = vmatpush.msra.mxu0 %v33
    %61 = vmatpush.msra.mxu0 %v32
    %62 = vmatpush.msra.mxu0 %v31
    %63 = vmatpush.msra.mxu0 %v30
    %64 = vmatpush.msra.mxu0 %v29
    %65 = vmatpush.msra.mxu0 %v28
    %66 = vmatpush.msra.mxu0 %v27
    %67 = vmatpush.msra.mxu0 %v26
    %68 = vmatpush.msra.mxu0 %v25
    %69 = vmatpush.msra.mxu0 %v24
    %70 = vmatpush.msra.mxu0 %v23
    %71 = vmatmul.f32.gmra.mxu0 %v21
    %v72 = vpop.f32.mrf.mxu0
    %v73 = vadd.f32 0.0, %v72
    %74 = vdwg.mxu0
    %75 = vmatpush.msra.mxu0 %v54
    %76 = vmatpush.msra.mxu0 %v53
    %77 = vmatpush.msra.mxu0 %v52
    %78 = vmatpush.msra.mxu0 %v51
    %79 = vmatpush.msra.mxu0 %v50
    %80 = vmatpush.msra.mxu0 %v49
    %81 = vmatpush.msra.mxu0 %v48
    %82 = vmatpush.msra.mxu0 %v47
    %83 = vmatpush.msra.mxu0 %v46
    %84 = vmatpush.msra.mxu0 %v45
    %85 = vmatpush.msra.mxu0 %v44
    %86 = vmatpush.msra.mxu0 %v43
    %87 = vmatpush.msra.mxu0 %v42
    %88 = vmatpush.msra.mxu0 %v41
    %89 = vmatpush.msra.mxu0 %v40
    %90 = vmatpush.msra.mxu0 %v39
    %91 = vmatmul.f32.gmra.mxu0 %v22
    %v92 = vpop.f32.mrf.mxu0
    %v93 = vadd.f32 %v73, %v92
    %94 = vdwg.mxu0
    %96 = vrot.lane.b32.xlu0 %v93, 111
    %v97 = vpop.permute.xlu0 %96
    %v99 = vmax.f32 %v93, %v97
    %v100 = vlaneseq
    %v101 = vand.u32 %v100, 127
    %vm102 = vcmp.ge.f32.partialorder %v93, %v97
    %v103 = vmul.u32 %v101, 2
    %v104 = vadd.s32 %v103, 1
    %v105 = vsel %vm102, %v103, %v104
    %vm106 = vcmask 138240
    %107 = vst.msk [vmem:[#allocation4] sm:$0xff] %vm106, %v105
    %v108 = vld [vmem:[%s2] sm:$0xff]
    %v109 = vld [vmem:[%s2 + $0x8] sm:$0xff]
    %v110 = vld [vmem:[%s2 + $0x10] sm:$0x1]
    %v111 = vld [vmem:[%s3] sm:$0x1]
    %v113 = vperm.slane %v111, 0
    %v116 = vsel %vm106, %v99, 0
    %vm118 = vcmask 1040384
    %v120 = vsel %vm118, %v110, 0
    %122 = vmatpush.msra.mxu0 0.0
    %123 = vmatpush.msra.mxu0 0.0
    %124 = vmatpush.msra.mxu0 0.0
    %125 = vmatpush.msra.mxu0 0.0
    %126 = vmatpush.msra.mxu0 0.0
    %127 = vmatpush.msra.mxu0 0.0
    %128 = vmatpush.msra.mxu0 0.0
    %129 = vmatpush.msra.mxu0 0.0
    %130 = vmatpush.msra.mxu0 0.0
    %131 = vmatpush.msra.mxu0 0.0
    %132 = vmatpush.msra.mxu0 0.0
    %133 = vmatpush.msra.mxu0 0.0
    %134 = vmatpush.msra.mxu0 0.0
    %135 = vmatpush.msra.mxu0 %v120
    %136 = vmatpush.msra.mxu0 %v109
    %137 = vmatpush.msra.mxu0 %v108
    %138 = vmatmul.f32.gmra.mxu0 %v116
    %v139 = vpop.f32.mrf.mxu0
    %v140 = vadd.f32 %v113, %v139
    %141 = vdwg.mxu0
    %vm142 = vcmask 64512
    %143 = vst.msk [vmem:[#allocation2] sm:$0xff] %vm142, %v140
    // Predicated region
    $region18: #{tpu_custom_call.1} parent=1 // pred_check
      _
    $region19: #{tpu_custom_call.1} parent=1 // pred_check_branch
      %145 = sbr.rel (0) target = $region21
    $region20: #{tpu_custom_call.1} parent=1 // pred_region
      %147 = vsyncadd [#allocation3], 0
      %s149 = sshll.u32 [#allocation2], 4
      %s150 = int_to_ptr.vmem [resolvable:$true] %s149
      %s151 = sshll.u32 %s4, 4
      %s152 = int_to_ptr.hbm [resolvable:$true] %s151
      %154 = dma.vmem_to_hbm [thread:$0]  %s150, 128, %s152, [#allocation3]
    $region21: #{tpu_custom_call.1} parent=1 // pred_fallthru
      _
    // Predicated region
    $region22: #{tpu_custom_call.1} parent=1 // pred_check
      _
    $region23: #{tpu_custom_call.1} parent=1 // pred_check_branch
      %156 = sbr.rel (0) target = $region25
    $region24: #{tpu_custom_call.1} parent=1 // pred_region
      %158 = vsyncadd [#allocation5], 0
      %s160 = sshll.u32 [#allocation4], 4
      %s161 = int_to_ptr.vmem [resolvable:$true] %s160
      %s162 = sshll.u32 %s5, 4
      %s163 = int_to_ptr.hbm [resolvable:$true] %s162
      %165 = dma.vmem_to_hbm [thread:$0]  %s161, 128, %s163, [#allocation5]
    $region25: #{tpu_custom_call.1} parent=1 // pred_fallthru
      _
    // Predicated region
    $region26: #{tpu_custom_call.1} parent=1 // pred_check
      _
    $region27: #{tpu_custom_call.1} parent=1 // pred_check_branch
      %167 = sbr.rel (0) target = $region29
    $region28: #{tpu_custom_call.1} parent=1 // pred_region
      %169 = dma.done [#allocation3], 128
    $region29: #{tpu_custom_call.1} parent=1 // pred_fallthru
      _
    // Predicated region
    $region30: #{tpu_custom_call.1} parent=1 // pred_check
      _
    $region31: #{tpu_custom_call.1} parent=1 // pred_check_branch
      %171 = sbr.rel (0) target = $region33
    $region32: #{tpu_custom_call.1} parent=1 // pred_region
      %173 = dma.done [#allocation5], 128
    $region33: #{tpu_custom_call.1} parent=1 // pred_fallthru
      _
    %174 = vsyncpa [#allocation3], 1
    %175 = vsyncpa [#allocation5], 1

</llo_original>
